<compile_context>
chip_gen: v7x
topology: tpu7x:2x2x1
jax: 0.10.0
libtpu: 0.0.40
codegen_flags: <defaults>
</compile_context>

<pallas_src>
import functools
import math

import jax
import jax.numpy as jnp
from jax.experimental import pallas as pl
from jax.experimental.pallas import tpu as pltpu

_MIB = 1024 * 1024


def _softplus_f32(s):
    # numerically stable softplus: max(s, 0) + log1p(exp(-|s|))
    return jnp.maximum(s, 0.0) + jnp.log1p(jnp.exp(-jnp.abs(s)))


def _loc_scale_fused_kernel(x_ref, loc_ref, scale_ref, *, eps, half):
    # Full-width input block; split on the lane axis inside the kernel.  When
    # half % 128 == 0 this is whole-vreg selection (no cross-lane relayout).
    # TODO(synk): for half < 128 a lane-dense (tm, half)->(tm*half/128, 128)
    # output repack would avoid masked vst.msk stores, but the required
    # lane-dim reshape is not reliably lowered by Mosaic, so it is skipped.
    x = x_ref[...]
    loc_ref[...] = x[:, :half]
    s = x[:, half:].astype(jnp.float32)
    scale_ref[...] = (eps + _softplus_f32(s)).astype(scale_ref.dtype)


def _loc_scale_split_kernel(loc_in_ref, scale_in_ref, loc_ref, scale_ref, *, eps):
    # Column split done by BlockSpec (x passed twice): loc is a pure DMA
    # pass-through, softplus runs only on the scale half.
    loc_ref[...] = loc_in_ref[...]
    s = scale_in_ref[...].astype(jnp.float32)
    scale_ref[...] = (eps + _softplus_f32(s)).astype(scale_ref.dtype)


def _vmem_limit_bytes():
    # v7x has 64 MiB VMEM per TensorCore (v5e/v6e: 128 MiB).  Derive the scoped
    # limit from the chip and keep ~25% headroom for compiler scratch.
    try:
        cap = int(pltpu.get_tpu_info().vmem_capacity_bytes)
    except Exception:
        cap = 64 * _MIB  # conservative fallback: v7x per-TC VMEM
    return max(32 * _MIB, min(cap * 3 // 4, 64 * _MIB))


def _row_vmem_bytes(n, half, itemsize):
    # Double-buffered per-row VMEM footprint: input row + loc-out row at the
    # input dtype, scale half counted at f32 width (covers upcast temporaries).
    return 2 * (n * itemsize + half * itemsize + half * max(4, itemsize))


def _choose_row_tile(rows, n, half, itemsize, target_block_bytes, footprint_budget):
    sub = max(8, 32 // itemsize)              # packed sublane multiple (8/16/32)
    # Cap by the double-buffered VMEM footprint.
    tm_vmem = max(sub, footprint_budget // _row_vmem_bytes(n, half, itemsize))
    # Target ~2-4 MiB of input per block so DMA time dominates the ~0.35 us
    # per-grid-step overhead (>= ~85% of HBM roofline in measured tile sweeps).
    tm_target = max(sub, target_block_bytes // max(1, n * itemsize))
    tm = min(tm_target, tm_vmem)
    # Keep >= 2 row blocks so the "parallel" axis feeds both TCs on v7x.
    if rows > sub:
        half_rows = -(-rows // 2)
        tm = min(tm, -(-half_rows // sub) * sub)
    tm = max(sub, (tm // sub) * sub)                   # sublane-multiple
    tm = min(tm, max(sub, -(-rows // sub) * sub))      # never > (rounded) rows
    return int(tm)


def location_scale(x, eps=1e-6, *, row_tile=None, target_block_bytes=4 * _MIB):
    """Pallas implementation of LocationScale.forward (identity activation)."""
    *lead, n = x.shape
    assert n % 2 == 0, "can only handle even number of features"
    half = n // 2

    rows = math.prod(lead) if lead else 1
    x2d = x.reshape(rows, n)

    itemsize = jnp.dtype(x.dtype).itemsize
    sub = max(8, 32 // itemsize)

    vmem_limit = _vmem_limit_bytes()
    footprint_budget = vmem_limit // 2        # headroom for pipelining/scratch

    if row_tile is not None:
        # Clamp a user-supplied tile against the sublane multiple and the
        # chip-derived VMEM limit so it cannot exceed the scoped budget.
        tm = max(sub, (int(row_tile) // sub) * sub)
        tm_vmem = max(
            sub,
            (footprint_budget // _row_vmem_bytes(n, half, itemsize) // sub) * sub)
        tm = min(tm, tm_vmem)
    else:
        tm = _choose_row_tile(rows, n, half, itemsize,
                              target_block_bytes, footprint_budget)
    grid = (pl.cdiv(rows, tm),)

    out_shape = (
        jax.ShapeDtypeStruct((rows, half), x.dtype),
        jax.ShapeDtypeStruct((rows, half), x.dtype),
    )
    out_specs = (
        pl.BlockSpec((tm, half), lambda i: (i, 0)),
        pl.BlockSpec((tm, half), lambda i: (i, 0)),
    )
    compiler_params = pltpu.CompilerParams(
        dimension_semantics=("parallel",),    # shards row blocks across TCs on v7x
        vmem_limit_bytes=vmem_limit,
    )
    cost = pl.CostEstimate(
        flops=4 * rows * half,
        transcendentals=2 * rows * half,            # exp + log1p per scale element
        bytes_accessed=2 * rows * n * itemsize,     # actual HBM traffic: read x, write loc+scale
    )

    # Use the BlockSpec column split only when each half-row is a long
    # contiguous run (>= 1 KiB); otherwise a single full-width input stream is
    # friendlier to HBM/DMA and the in-kernel split costs nothing.
    use_split = (half % 128 == 0) and (half * itemsize >= 1024)

    if use_split:
        kernel = functools.partial(_loc_scale_split_kernel, eps=eps)
        loc2d, scale2d = pl.pallas_call(
            kernel,
            out_shape=out_shape,
            grid_spec=pltpu.PrefetchScalarGridSpec(
                num_scalar_prefetch=0,
                grid=grid,
                in_specs=[
                    pl.BlockSpec((tm, half), lambda i: (i, 0)),   # loc half
                    pl.BlockSpec((tm, half), lambda i: (i, 1)),   # scale half
                ],
                out_specs=out_specs,
            ),
            compiler_params=compiler_params,
            cost_estimate=cost,
        )(x2d, x2d)
    else:
        kernel = functools.partial(_loc_scale_fused_kernel, eps=eps, half=half)
        loc2d, scale2d = pl.pallas_call(
            kernel,
            out_shape=out_shape,
            grid_spec=pltpu.PrefetchScalarGridSpec(
                num_scalar_prefetch=0,
                grid=grid,
                in_specs=[pl.BlockSpec((tm, n), lambda i: (i, 0))],
                out_specs=out_specs,
            ),
            compiler_params=compiler_params,
            cost_estimate=cost,
        )(x2d)

    loc = loc2d.reshape(*lead, half)
    scale = scale2d.reshape(*lead, half)
    return loc, scale


def _check(x, eps=1e-6, atol=1e-5, rtol=1e-5):
    loc, scale = location_scale(x, eps=eps)
    jax.block_until_ready((loc, scale))
    half = x.shape[-1] // 2
    xf = x.astype(jnp.float32)
    ref_loc = xf[..., :half]
    ref_scale = eps + jax.nn.softplus(xf[..., half:])
    assert loc.shape == (*x.shape[:-1], half)
    assert scale.shape == (*x.shape[:-1], half)
    assert jnp.allclose(loc.astype(jnp.float32), ref_loc, atol=atol, rtol=rtol)
    assert jnp.allclose(scale.astype(jnp.float32), ref_scale, atol=atol, rtol=rtol)


if __name__ == "__main__":
    key = jax.random.PRNGKey(0)
    k1, k2, k3, k4 = jax.random.split(key, 4)

    # half = 32 (< 128): fused full-width path, in-kernel lane split.
    _check(jax.random.normal(k1, (2, 8, 64), dtype=jnp.float32))

    # half = 128: fused full-width path (contiguous input stream beats
    # half-width strided column DMAs at this size).
    _check(jax.random.normal(k2, (4, 8, 256), dtype=jnp.float32))

    # half = 256 (>= 1 KiB contiguous per row): BlockSpec column-split path.
    _check(jax.random.normal(k3, (2, 16, 512), dtype=jnp.float32))

    # bf16: packed-sublane (16-row) tile rounding, softplus computed in f32.
    _check(jax.random.normal(k4, (4, 16, 256), dtype=jnp.bfloat16),
           atol=2e-2, rtol=2e-2)

    print("KERNEL_OK")
</pallas_src>

<mosaic_0001>
module attributes {stable_mosaic.version = 11 : i64} {
  func.func @_loc_scale_fused_kernel(%arg0: i32, %arg1: memref<8x64xf32, #tpu.memory_space<vmem>>, %arg2: memref<8x32xf32, #tpu.memory_space<vmem>>, %arg3: memref<8x32xf32, #tpu.memory_space<vmem>>) attributes {dimension_semantics = [#tpu.dimension_semantics<parallel>], iteration_bounds = array<i64: 2>, scalar_prefetch = 0 : i64, scratch_operands = 0 : i64, tpu.core_type = #tpu.core_type<tc>, window_params = [{transform_indices = @transform_0, window_bounds = array<i64: 8, 64>}, {transform_indices = @transform_1, window_bounds = array<i64: 8, 32>}, {transform_indices = @transform_2, window_bounds = array<i64: 8, 32>}]} {
    %c0 = arith.constant 0 : index
    %c0_0 = arith.constant 0 : index
    %0 = vector.load %arg1[%c0, %c0_0] : memref<8x64xf32, #tpu.memory_space<vmem>>, vector<8x64xf32>
    %1 = vector.extract_strided_slice %0 {offsets = [0, 0], sizes = [8, 32], strides = [1, 1]} : vector<8x64xf32> to vector<8x32xf32>
    %c0_1 = arith.constant 0 : index
    %c0_2 = arith.constant 0 : index
    %2 = vector.load %arg2[%c0_1, %c0_2] : memref<8x32xf32, #tpu.memory_space<vmem>>, vector<8x32xf32>
    tpu.vector_store %arg2[%c0_1, %c0_2], %1 {strides = array<i32>} : memref<8x32xf32, #tpu.memory_space<vmem>>, vector<8x32xf32>,
    %3 = vector.extract_strided_slice %0 {offsets = [0, 32], sizes = [8, 32], strides = [1, 1]} : vector<8x64xf32> to vector<8x32xf32>
    %cst = arith.constant 0.000000e+00 : f32
    %4 = vector.broadcast %cst : f32 to vector<8x32xf32>
    %5 = arith.maximumf %3, %4 : vector<8x32xf32>
    %6 = math.absf %3 : vector<8x32xf32>
    %cst_3 = arith.constant 0.000000e+00 : f32
    %7 = vector.broadcast %cst_3 : f32 to vector<8x32xf32>
    %8 = arith.subf %7, %6 : vector<8x32xf32>
    %9 = math.exp %8 : vector<8x32xf32>
    %10 = math.log1p %9 : vector<8x32xf32>
    %11 = arith.addf %5, %10 : vector<8x32xf32>
    %cst_4 = arith.constant 9.99999997E-7 : f32
    %12 = vector.broadcast %cst_4 : f32 to vector<8x32xf32>
    %13 = arith.addf %12, %11 : vector<8x32xf32>
    %c0_5 = arith.constant 0 : index
    %c0_6 = arith.constant 0 : index
    %14 = vector.load %arg3[%c0_5, %c0_6] : memref<8x32xf32, #tpu.memory_space<vmem>>, vector<8x32xf32>
    tpu.vector_store %arg3[%c0_5, %c0_6], %13 {strides = array<i32>} : memref<8x32xf32, #tpu.memory_space<vmem>>, vector<8x32xf32>,
    return
  }
  func.func @transform_0(%arg0: i32) -> (i32, i32) {
    %c0_i32 = arith.constant 0 : i32
    %c0_i32_0 = arith.constant 0 : i32
    return %arg0, %c0_i32 : i32, i32
  }
  func.func @transform_1(%arg0: i32) -> (i32, i32) {
    %c0_i32 = arith.constant 0 : i32
    %c0_i32_0 = arith.constant 0 : i32
    return %arg0, %c0_i32 : i32, i32
  }
  func.func @transform_2(%arg0: i32) -> (i32, i32) {
    %c0_i32 = arith.constant 0 : i32
    %c0_i32_0 = arith.constant 0 : i32
    return %arg0, %c0_i32 : i32, i32
  }
}

</mosaic_0001>

<llo_original>
// kernel: tpu_custom_call.1
$region0: #{tpu_custom_call.1}
  #allocation0 [shape = 'u32[]', space=smem, size = 0x4, offset = 0x4, fixed_abs, tag = 'smem constant byte address 0x4 - core index']
  #allocation1 [shape = 'u32[144,128]{1,0:T(1,128)}', space=vmem, size = 0x12000, scoped, tag = 'internal scratch']
  %s0 = inlined_call_operand.hbm [shape: f32[16,64], index: 0, kind: input, shape index: {}]
  %s1 = inlined_call_operand.hbm [shape: f32[16,32], index: 1, kind: output, shape index: {0}]
  %s2 = inlined_call_operand.hbm [shape: f32[16,32], index: 2, kind: output, shape index: {1}]
  %3 = xla_tuple %s1, %s2
  %s4 = sld [smem:[#allocation0]]
  $region49: #{tpu_custom_call.1} parent=0
    _
  %s6 = ssub.s32 1, %s4
  %s7 = scalar_select 0, %s6, %s4
  $region1: #{tpu_custom_call.1} parent=0
    #allocation2 [shape = 'u8[8192]{0}', space=vmem, size = 0x2000, scoped, tag = 'input window, operand 0']
    #allocation3 [shape = 's32[2]{0}', space=sflag, size = 0x8, scoped, tag = 'scoped memory for tpu_custom_call.1']
    #allocation4 [shape = 's32[2]{0}', space=sflag, size = 0x8, scoped, tag = 'scoped memory for tpu_custom_call.1']
    #allocation5 [shape = 'u8[8192]{0}', space=vmem, size = 0x2000, scoped, tag = 'output window, operand 0']
    #allocation6 [shape = 'u8[8192]{0}', space=vmem, size = 0x2000, scoped, tag = 'output window, operand 1']
    #allocation7 [shape = 's32[2]{0}', space=sflag, size = 0x8, scoped, tag = 'scoped memory for tpu_custom_call.1']
    %8 = vsyncpa [#allocation3], 0
    %s9 = scalar_lea.sflag [#allocation3], 1
    %10 = vsyncpa %s9, 0
    %11 = vsyncpa [#allocation4], 0
    %s12 = scalar_lea.sflag [#allocation4], 1
    %13 = vsyncpa %s12, 0
    %14 = vsyncpa [#allocation7], 0
    %s15 = scalar_lea.sflag [#allocation7], 1
    %16 = vsyncpa %s15, 0
    loop: start=0, step=1, limit=4
    $region2: #{tpu_custom_call.1} parent=1 // loop_pre_header
      _
    $region3: #{tpu_custom_call.1} parent=1 // loop_header
      %s18 = sphi 0, %s22
      %p19 = scmp.ge.s32.totalorder %s18, 4
      %s28 = sphi 0, %s30
      %s31 = sphi 0, %s28
      %s32 = sphi 0, %s31
      %s48 = sphi 0, %s32
      %s54 = sphi 0, %s56
      %s57 = sphi 0, %s54
      %s58 = sphi 0, %s57
      %s74 = sphi 0, %s58
      %s80 = sphi 0, %s82
      %s83 = sphi 0, %s80
      %s84 = sphi 0, %s83
      %s100 = sphi 0, %s84
    $region4: #{tpu_custom_call.1} parent=1 // loop_header_branch
      %21 = sbr.rel (%p19) target = $region8
    $region5: #{tpu_custom_call.1} parent=1 // loop_body
      %s23 = ssub.s32 %s18, 1
      %s24 = ssub.s32 %s18, 2
      %s25 = sadd.s32 %s18, 1
      %s26 = ssub.s32 %s18, %s25
      %p27 = scmp.eq.s32.totalorder %s26, 0
      %s29 = sadd.s32 %s28, 1
      %s30 = scalar_select %p27, %s28, %s29
      %p33 = pneg %p27
      %p34 = scmp.eq.s32.totalorder %s18, 1
      %p35 = por %p33, %p34
      %p36 = scmp.ne.s32.totalorder %s28, %s31
      %p37 = scmp.eq.s32.totalorder %s18, 0
      %p38 = por %p36, %p37
      %p39 = scmp.ne.s32.totalorder %s28, %s31
      %p40 = scmp.eq.s32.totalorder %s23, 1
      %p41 = por %p39, %p40
      %p42 = scmp.ne.s32.totalorder %s31, %s32
      %p43 = scmp.eq.s32.totalorder %s23, 0
      %p44 = por %p42, %p43
      %p45 = scmp.ne.s32.totalorder %s31, %s32
      %p46 = scmp.eq.s32.totalorder %s24, 1
      %p47 = por %p45, %p46
      %p49 = scmp.ne.s32.totalorder %s32, %s48
      %p50 = scmp.eq.s32.totalorder %s24, 0
      %p51 = por %p49, %p50
      %s52 = ssub.s32 %s18, %s25
      %p53 = scmp.eq.s32.totalorder %s52, 0
      %s55 = sadd.s32 %s54, 1
      %s56 = scalar_select %p53, %s54, %s55
      %p59 = pneg %p53
      %p60 = scmp.eq.s32.totalorder %s18, 1
      %p61 = por %p59, %p60
      %p62 = scmp.ne.s32.totalorder %s54, %s57
      %p63 = scmp.eq.s32.totalorder %s18, 0
      %p64 = por %p62, %p63
      %p65 = scmp.ne.s32.totalorder %s54, %s57
      %p66 = scmp.eq.s32.totalorder %s23, 1
      %p67 = por %p65, %p66
      %p68 = scmp.ne.s32.totalorder %s57, %s58
      %p69 = scmp.eq.s32.totalorder %s23, 0
      %p70 = por %p68, %p69
      %p71 = scmp.ne.s32.totalorder %s57, %s58
      %p72 = scmp.eq.s32.totalorder %s24, 1
      %p73 = por %p71, %p72
      %p75 = scmp.ne.s32.totalorder %s58, %s74
      %p76 = scmp.eq.s32.totalorder %s24, 0
      %p77 = por %p75, %p76
      %s78 = ssub.s32 %s18, %s25
      %p79 = scmp.eq.s32.totalorder %s78, 0
      %s81 = sadd.s32 %s80, 1
      %s82 = scalar_select %p79, %s80, %s81
      %p85 = pneg %p79
      %p86 = scmp.eq.s32.totalorder %s18, 1
      %p87 = por %p85, %p86
      %p88 = scmp.ne.s32.totalorder %s80, %s83
      %p89 = scmp.eq.s32.totalorder %s18, 0
      %p90 = por %p88, %p89
      %p91 = scmp.ne.s32.totalorder %s80, %s83
      %p92 = scmp.eq.s32.totalorder %s23, 1
      %p93 = por %p91, %p92
      %p94 = scmp.ne.s32.totalorder %s83, %s84
      %p95 = scmp.eq.s32.totalorder %s23, 0
      %p96 = por %p94, %p95
      %p97 = scmp.ne.s32.totalorder %s83, %s84
      %p98 = scmp.eq.s32.totalorder %s24, 1
      %p99 = por %p97, %p98
      %p101 = scmp.ne.s32.totalorder %s84, %s100
      %p102 = scmp.eq.s32.totalorder %s24, 0
      %p103 = por %p101, %p102
      %p104 = scmp.le.s32.totalorder 1, %s18
      %p105 = scmp.lt.s32.totalorder %s18, 3
      %p106 = pnand %p104, %p105
      %p107 = pneg %p106
      // Predicated region
      $region9: #{tpu_custom_call.1} parent=5 // pred_check
        _
      $region10: #{tpu_custom_call.1} parent=5 // pred_check_branch
        %109 = sbr.rel (%p106) target = $region12
      $region11: #{tpu_custom_call.1} parent=5 // pred_region
        %s110 = ssub.s32 %s18, 1
      $region12: #{tpu_custom_call.1} parent=5 // pred_fallthru
        _
      %p111 = scmp.lt.s32.totalorder %s18, 2
      // Predicated region
      $region13: #{tpu_custom_call.1} parent=5 // pred_check
        %p112 = pneg %p111
      $region14: #{tpu_custom_call.1} parent=5 // pred_check_branch
        %114 = sbr.rel (%p112) target = $region16
      $region15: #{tpu_custom_call.1} parent=5 // pred_region
        // Predicated region
        $region17: #{tpu_custom_call.1} parent=15 // pred_check
          %p115 = pneg %p38
        $region18: #{tpu_custom_call.1} parent=15 // pred_check_branch
          %117 = sbr.rel (%p115) target = $region20
        $region19: #{tpu_custom_call.1} parent=15 // pred_region
          %s118 = sand.u32 %s28, 1
          %s119 = scalar_lea.sflag [#allocation3], %s118
          %s120 = sand.u32 %s28, 1
          %s121 = smul.addr %s120, 8
          %s122 = scalar_lea.vmem [#allocation2], %s121
          %s124 = ssub.s32 128, 128
          %125 = vsyncadd %s119, %s124
          %s126 = smul.addr %s18, 128
          %s127 = scalar_lea.hbm %s0, %s126
          %s129 = sshll.u32 %s122, 4
          %s130 = int_to_ptr.vmem [resolvable:$true] %s129
          %132 = dma.hbm_to_vmem [thread:$0]  %s127, 128, %s130, %s119
        $region20: #{tpu_custom_call.1} parent=15 // pred_fallthru
          _
      $region16: #{tpu_custom_call.1} parent=5 // pred_fallthru
        _
      %p133 = scmp.le.s32.totalorder 1, %s18
      %p134 = scmp.lt.s32.totalorder %s18, 3
      %p135 = pnand %p133, %p134
      %p136 = pneg %p135
      // Predicated region
      $region21: #{tpu_custom_call.1} parent=5 // pred_check
        _
      $region22: #{tpu_custom_call.1} parent=5 // pred_check_branch
        %138 = sbr.rel (%p135) target = $region24
      $region23: #{tpu_custom_call.1} parent=5 // pred_region
        %s139 = ssub.s32 %s18, 1
        %s140 = sand.u32 %s31, 1
        %s141 = scalar_lea.sflag [#allocation3], %s140
        %s142 = sand.u32 %s31, 1
        %s143 = smul.addr %s142, 8
        %s144 = scalar_lea.vmem [#allocation2], %s143
        // Predicated region
        $region25: #{tpu_custom_call.1} parent=23 // pred_check
          %p145 = pneg %p44
        $region26: #{tpu_custom_call.1} parent=23 // pred_check_branch
          %147 = sbr.rel (%p145) target = $region28
        $region27: #{tpu_custom_call.1} parent=23 // pred_region
          %148 = dma.done %s141, 128
        $region28: #{tpu_custom_call.1} parent=23 // pred_fallthru
          _
        %s149 = sand.u32 %s31, 1
        %s150 = scalar_lea.sflag [#allocation3], %s149
        %s151 = sand.u32 %s31, 1
        %s152 = smul.addr %s151, 8
        %s153 = scalar_lea.vmem [#allocation2], %s152
        %p154 = pneg %p44
        %p155 = pneg %p41
        %p156 = pneg %p70
        %p157 = pneg %p67
        %s158 = sand.u32 %s57, 1
        %s159 = scalar_lea.sflag [#allocation4], %s158
        %s160 = sand.u32 %s57, 1
        %s161 = smul.addr %s160, 8
        %s162 = scalar_lea.vmem [#allocation5], %s161
        %p163 = pneg %p96
        %p164 = pneg %p93
        %s165 = sand.u32 %s83, 1
        %s166 = scalar_lea.sflag [#allocation7], %s165
        %s167 = sand.u32 %s83, 1
        %s168 = smul.addr %s167, 8
        %s169 = scalar_lea.vmem [#allocation6], %s168
        %v170 = vld [vmem:[%s144] sm:$0xff]
        %vm171 = vcmask 261120
        %172 = vst.msk [vmem:[%s162] sm:$0xff] %vm171, %v170
        %v173 = vmax.f32 %v170, 0.0
        %v174 = vand.u32 2147483647, %v170
        %v175 = vsub.f32 0.0, %v174
        %v176 = vmul.f32 %v175, 1.442695
        %v177 = vpow.pop %v176
        %v178 = vadd.f32 %v177, 1.0
        %v179 = vlog2.pop %v178
        %v180 = vmul.f32 %v179, 0.6931472
        %v181 = vmul.f32 -0.5, %v177
        %v182 = vadd.f32 %v181, 1.0
        %v183 = vmul.f32 %v182, %v177
        %v184 = vand.u32 2147483647, %v177
        %vm185 = vcmp.lt.f32.partialorder %v184, 0.0004427343
        %v186 = vsel %vm185, %v183, %v180
        %v187 = vadd.f32 %v173, %v186
        %v188 = vadd.f32 %v187, 1e-06
        %190 = vrot.lane.b32.xlu0 %v188, 96
        %v191 = vpop.permute.xlu0 %190
        %193 = vst.msk [vmem:[%s169] sm:$0xff] %vm171, %v191
        %s194 = sand.u32 %s57, 1
        %s195 = scalar_lea.sflag [#allocation4], %s194
        %s196 = sand.u32 %s57, 1
        %s197 = smul.addr %s196, 8
        %s198 = scalar_lea.vmem [#allocation5], %s197
        %s199 = sand.u32 %s83, 1
        %s200 = scalar_lea.sflag [#allocation7], %s199
        %s201 = sand.u32 %s83, 1
        %s202 = smul.addr %s201, 8
        %s203 = scalar_lea.vmem [#allocation6], %s202
        // Predicated region
        $region29: #{tpu_custom_call.1} parent=23 // pred_check
          %p204 = pneg %p67
        $region30: #{tpu_custom_call.1} parent=23 // pred_check_branch
          %206 = sbr.rel (%p204) target = $region32
        $region31: #{tpu_custom_call.1} parent=23 // pred_region
          %s208 = ssub.s32 128, 128
          %209 = vsyncadd %s195, %s208
          %s210 = smul.addr %s23, 128
          %s211 = scalar_lea.hbm %s1, %s210
          %s213 = sshll.u32 %s198, 4
          %s214 = int_to_ptr.vmem [resolvable:$true] %s213
          %216 = dma.vmem_to_hbm [thread:$0]  %s214, 128, %s211, %s195
        $region32: #{tpu_custom_call.1} parent=23 // pred_fallthru
          _
        // Predicated region
        $region33: #{tpu_custom_call.1} parent=23 // pred_check
          %p217 = pneg %p93
        $region34: #{tpu_custom_call.1} parent=23 // pred_check_branch
          %219 = sbr.rel (%p217) target = $region36
        $region35: #{tpu_custom_call.1} parent=23 // pred_region
          %s221 = ssub.s32 128, 128
          %222 = vsyncadd %s200, %s221
          %s223 = smul.addr %s23, 128
          %s224 = scalar_lea.hbm %s2, %s223
          %s226 = sshll.u32 %s203, 4
          %s227 = int_to_ptr.vmem [resolvable:$true] %s226
          %229 = dma.vmem_to_hbm [thread:$0]  %s227, 128, %s224, %s200
        $region36: #{tpu_custom_call.1} parent=23 // pred_fallthru
          _
      $region24: #{tpu_custom_call.1} parent=5 // pred_fallthru
        _
      %p230 = scmp.le.s32.totalorder 2, %s18
      // Predicated region
      $region37: #{tpu_custom_call.1} parent=5 // pred_check
        %p231 = pneg %p230
      $region38: #{tpu_custom_call.1} parent=5 // pred_check_branch
        %233 = sbr.rel (%p231) target = $region40
      $region39: #{tpu_custom_call.1} parent=5 // pred_region
        %s234 = ssub.s32 %s18, 2
        // Predicated region
        $region41: #{tpu_custom_call.1} parent=39 // pred_check
          %p235 = pneg %p73
        $region42: #{tpu_custom_call.1} parent=39 // pred_check_branch
          %237 = sbr.rel (%p235) target = $region44
        $region43: #{tpu_custom_call.1} parent=39 // pred_region
          %s238 = sand.u32 %s58, 1
          %s239 = scalar_lea.sflag [#allocation4], %s238
          %s240 = sand.u32 %s58, 1
          %s241 = smul.addr %s240, 8
          %s242 = scalar_lea.vmem [#allocation5], %s241
          %243 = dma.done %s239, 128
        $region44: #{tpu_custom_call.1} parent=39 // pred_fallthru
          _
        // Predicated region
        $region45: #{tpu_custom_call.1} parent=39 // pred_check
          %p244 = pneg %p99
        $region46: #{tpu_custom_call.1} parent=39 // pred_check_branch
          %246 = sbr.rel (%p244) target = $region48
        $region47: #{tpu_custom_call.1} parent=39 // pred_region
          %s247 = sand.u32 %s84, 1
          %s248 = scalar_lea.sflag [#allocation7], %s247
          %s249 = sand.u32 %s84, 1
          %s250 = smul.addr %s249, 8
          %s251 = scalar_lea.vmem [#allocation6], %s250
          %252 = dma.done %s248, 128
        $region48: #{tpu_custom_call.1} parent=39 // pred_fallthru
          _
      $region40: #{tpu_custom_call.1} parent=5 // pred_fallthru
        _
    $region6: #{tpu_custom_call.1} parent=1 // loop_footer
      %s22 = sadd.s32 1, %s18
    $region7: #{tpu_custom_call.1} parent=1 // loop_footer_branch
      %17 = sbr.rel target = $region3
    $region8: #{tpu_custom_call.1} parent=1 // loop_exit
      _
    %253 = vsyncpa [#allocation3], 1
    %s254 = scalar_lea.sflag [#allocation3], 1
    %255 = vsyncpa %s254, 1
    %256 = vsyncpa [#allocation4], 1
    %s257 = scalar_lea.sflag [#allocation4], 1
    %258 = vsyncpa %s257, 1
    %259 = vsyncpa [#allocation7], 1
    %s260 = scalar_lea.sflag [#allocation7], 1
    %261 = vsyncpa %s260, 1

</llo_original>
